<compile_context>
chip_gen: v5e
topology: v5e:2x2
jax: 0.10.0
libtpu: 0.0.40
codegen_flags: <defaults>
</compile_context>

<pallas_src>
import functools

import jax
import jax.numpy as jnp
from jax.experimental import pallas as pl
from jax.experimental.pallas import tpu as pltpu


_NC = 11  # hoisted per-default-box constants (rows of db_consts)


def _round_up(x, m):
    return ((x + m - 1) // m) * m


# --------------------------------------------------------------------------
# shared in-kernel math (lane-dense: D on the lane axis)
# --------------------------------------------------------------------------
def _iou_tile(bobj, dbc):
    """IoU between every gt object and every default box of the tile.

    bobj: (N, 5)        columns = [xmin, ymin, xmax, ymax, label]
    dbc:  (_NC, TILE_D) hoisted default-box constants (D on lanes)
    returns iou (N, TILE_D)
    """
    xmin_o = bobj[:, 0:1]
    ymin_o = bobj[:, 1:2]
    xmax_o = bobj[:, 2:3]
    ymax_o = bobj[:, 3:4]                      # (N, 1)

    dxmin = dbc[0:1, :]
    dymin = dbc[1:2, :]
    dxmax = dbc[2:3, :]
    dymax = dbc[3:4, :]
    area_d = dbc[4:5, :]                       # (1, TILE_D)

    iw = jnp.maximum(jnp.minimum(xmax_o, dxmax) - jnp.maximum(xmin_o, dxmin), 0.0)
    ih = jnp.maximum(jnp.minimum(ymax_o, dymax) - jnp.maximum(ymin_o, dymin), 0.0)
    inter = iw * ih                            # (N, TILE_D)
    area_o = (xmax_o - xmin_o) * (ymax_o - ymin_o)
    return inter / (area_o + area_d - inter)


# --------------------------------------------------------------------------
# kernel 1: per-object best default box (global argmax over D, tiled carry)
#   grid = (n_tiles,) "arbitrary"; whole batch handled per tile.
# --------------------------------------------------------------------------
def _bestdb_kernel(bobj_ref, dbc_ref, bestdb_ref, bestov_ref, *, tile_d, d_pad):
    t = pl.program_id(0)
    bobj = bobj_ref[...]                        # (B*n_obj, 5)
    dbc = dbc_ref[...]                          # (_NC, TILE_D)

    iou = _iou_tile(bobj, dbc)                  # (BN, TILE_D)
    tile_max = jnp.max(iou, axis=1, keepdims=True)                       # (BN, 1)
    d_glob = t * tile_d + jax.lax.broadcasted_iota(jnp.int32, iou.shape, 1)
    # min-index tie-break inside the tile
    tile_arg = jnp.min(jnp.where(iou >= tile_max, d_glob, d_pad),
                       axis=1, keepdims=True)                            # (BN, 1)

    @pl.when(t == 0)
    def _():
        bestov_ref[...] = jnp.full(bestov_ref.shape, -1.0, bestov_ref.dtype)
        bestdb_ref[...] = jnp.zeros(bestdb_ref.shape, bestdb_ref.dtype)

    # strict '>' keeps the earliest tile on ties -> global min-index tie-break
    upd = tile_max > bestov_ref[...]
    bestdb_ref[...] = jnp.where(upd, tile_arg, bestdb_ref[...])
    bestov_ref[...] = jnp.where(upd, tile_max, bestov_ref[...])


# --------------------------------------------------------------------------
# kernel 2: fused matching + per-box CE / SmoothL1, tiled over D (lane-dense)
#   grid = (n_tiles, B) both "parallel"; db_consts resident across inner B.
# --------------------------------------------------------------------------
def _fused_kernel(boxes_ref, bestdb_ref, dbc_ref, cls_ref, locs_ref,
                  conf_ref, stats_ref, *, threshold, d_real, tile_d):
    bobj = boxes_ref[0]                                  # (n_obj, 5) f32
    bdb = bestdb_ref[0]                                  # (n_obj, 1) int32
    dbc = dbc_ref[...]                                   # (_NC, TILE_D) f32
    cls_x = cls_ref[0].astype(jnp.float32)               # (C, TILE_D)
    locs = locs_ref[0].astype(jnp.float32)               # (4, TILE_D)
    n_obj = bobj.shape[0]
    num_c = cls_x.shape[0]
    td = dbc.shape[1]

    # ---- matching -------------------------------------------------------
    iou = _iou_tile(bobj, dbc)                           # (n_obj, TILE_D)
    o_iota = jax.lax.broadcasted_iota(jnp.int32, (n_obj, td), 0)

    best_ov = jnp.max(iou, axis=0, keepdims=True)                          # (1, TILE_D)
    best_obj = jnp.min(jnp.where(iou >= best_ov, o_iota, n_obj),
                       axis=0, keepdims=True)                              # (1, TILE_D)

    d_glob = (pl.program_id(0) * tile_d
              + jax.lax.broadcasted_iota(jnp.int32, (1, td), 1))           # (1, TILE_D)
    forced = bdb == d_glob                                                 # (n_obj, TILE_D)
    is_forced = jnp.max(forced.astype(jnp.int32), axis=0, keepdims=True) > 0
    forced_obj = jnp.max(jnp.where(forced, o_iota, -1), axis=0, keepdims=True)
    assigned = jnp.where(is_forced, forced_obj, best_obj)                  # (1, TILE_D)
    overlap = jnp.where(is_forced, 1.0, best_ov)                           # (1, TILE_D)

    # one-hot gather of the matched object's box coords + label
    ohf = (o_iota == assigned).astype(jnp.float32)                         # (n_obj, TILE_D)

    def gather(col):  # (n_obj, 1) -> (1, TILE_D)   (sublane reduce, cheap)
        return jnp.sum(ohf * col, axis=0, keepdims=True)

    mxmin = gather(bobj[:, 0:1])
    mymin = gather(bobj[:, 1:2])
    mxmax = gather(bobj[:, 2:3])
    mymax = gather(bobj[:, 3:4])
    mlab = gather(bobj[:, 4:5])
    # TODO(synk): these 5 gathers could be one MXU dot (bobj^T @ ohf); only
    # worth it if a bundle dump shows VPU/XLU saturation post layout-flip.

    valid = d_glob < d_real                                                # mask padded D
    t_cls_f = jnp.where((overlap >= threshold) & valid, mlab, 0.0)         # (1, TILE_D)
    t_cls_i = t_cls_f.astype(jnp.int32)
    pos = (t_cls_i != 0).astype(jnp.float32)                               # (1, TILE_D)

    # ---- target encoding (hoisted constants: multiplies/adds only) -------
    dcx = dbc[5:6, :]
    dcy = dbc[6:7, :]
    inv_w = dbc[7:8, :]        # 10 / dw
    inv_h = dbc[8:9, :]        # 10 / dh
    lw5 = dbc[9:10, :]         # 5 * log(dw)
    lh5 = dbc[10:11, :]        # 5 * log(dh)

    mcx = (mxmin + mxmax) * 0.5
    mcy = (mymin + mymax) * 0.5
    mw = mxmax - mxmin
    mh = mymax - mymin
    gcx = (mcx - dcx) * inv_w
    gcy = (mcy - dcy) * inv_h
    gw = 5.0 * jnp.log(mw) - lw5
    gh = 5.0 * jnp.log(mh) - lh5

    # ---- SmoothL1 over positives (sum only; reduced in-kernel) -----------
    def sl1(d):
        ad = jnp.abs(d)
        return jnp.where(ad < 1.0, 0.5 * d * d, ad - 0.5)

    l_box = (sl1(locs[0:1, :] - gcx) + sl1(locs[1:2, :] - gcy)
             + sl1(locs[2:3, :] - gw) + sl1(locs[3:4, :] - gh))            # (1, TILE_D)

    # ---- per-box cross entropy (C on sublanes, D on lanes) ----------------
    m = jnp.max(cls_x, axis=0, keepdims=True)                              # (1, TILE_D)
    lse = m + jnp.log(jnp.sum(jnp.exp(cls_x - m), axis=0, keepdims=True))
    c_iota = jax.lax.broadcasted_iota(jnp.int32, (num_c, td), 0)
    picked = jnp.sum(jnp.where(c_iota == t_cls_i, cls_x, 0.0),
                     axis=0, keepdims=True)
    conf = jnp.where(valid, lse - picked, 0.0)                             # (1, TILE_D)

    # ---- outputs ----------------------------------------------------------
    # negatives-only CE map (positives & padding zeroed -> ready for top-k),
    # written as a lane-dense (1, TILE_D) row.
    conf_ref[0] = jnp.where(pos > 0, 0.0, conf)

    n_pos_s = jnp.sum(pos, axis=1, keepdims=True)                          # (1, 1)
    cpos_s = jnp.sum(pos * conf, axis=1, keepdims=True)                    # (1, 1)
    lsum_s = jnp.sum(pos * l_box, axis=1, keepdims=True)                   # (1, 1)
    lane = jax.lax.broadcasted_iota(jnp.int32, (1, 128), 1)
    stats_ref[0, 0] = (jnp.where(lane == 0, n_pos_s, 0.0)
                       + jnp.where(lane == 1, cpos_s, 0.0)
                       + jnp.where(lane == 2, lsum_s, 0.0))


# --------------------------------------------------------------------------
# wrapper (Pallas path)
# --------------------------------------------------------------------------
def multibox_loss(locs_pred, cls_pred, boxes, labels, default_boxes,
                  threshold=0.5, neg_pos=3, alpha=1.0,
                  tile_d=2048, hard_neg_cap=512):
    """locs_pred (B,D,4), cls_pred (B,D,C), boxes (B,n_obj,4) xy,
    labels (B,n_obj) int > 0, default_boxes (D,4) cxcy.

    tile_d: D tile (multiple of 128).  Even at 2048 / f32 / C=21 the
            double-buffered working set is < ~2 MiB, far below VMEM on every
            TPU generation, so bigger is better (amortizes grid-step cost).
    hard_neg_cap: static top-k bound for hard-negative mining; exact as long
            as neg_pos * n_pos <= hard_neg_cap per image.
    """
    B, D, C = cls_pred.shape
    n_obj = boxes.shape[1]
    f32 = jnp.float32

    tile_d = _round_up(min(int(tile_d), _round_up(D, 128)), 128)
    d_pad = _round_up(D, tile_d)
    n_tiles = d_pad // tile_d

    # ---- hoisted default-box constants, D lane-dense: (_NC, d_pad) --------
    db = jnp.asarray(default_boxes, f32)                                    # (D,4) cxcy
    if d_pad != D:
        # far-away unit boxes: zero IoU with any real object, finite encodings
        pad_db = jnp.tile(jnp.asarray([[-10.0, -10.0, 1.0, 1.0]], f32),
                          (d_pad - D, 1))
        db = jnp.concatenate([db, pad_db], axis=0)
    dcx, dcy, dw, dh = db[:, 0], db[:, 1], db[:, 2], db[:, 3]
    dxmin = dcx - dw * 0.5
    dymin = dcy - dh * 0.5
    dxmax = dcx + dw * 0.5
    dymax = dcy + dh * 0.5
    area_d = (dxmax - dxmin) * (dymax - dymin)
    db_consts = jnp.stack([dxmin, dymin, dxmax, dymax, area_d, dcx, dcy,
                           10.0 / dw, 10.0 / dh,
                           5.0 * jnp.log(dw), 5.0 * jnp.log(dh)],
                          axis=0)                                           # (_NC, d_pad)

    # ---- tiny ground-truth tensor: objects on sublanes, 5 attrs on lanes ---
    boxes_obj = jnp.concatenate(
        [boxes.astype(f32), labels.astype(f32)[..., None]], axis=-1)        # (B,n_obj,5)
    boxes_flat = boxes_obj.reshape(B * n_obj, 5)                            # (BN,5)

    # ---- predictions: D lane-dense, keep the network dtype -----------------
    cls_t = jnp.transpose(cls_pred, (0, 2, 1))                              # (B,C,D)
    locs_t = jnp.transpose(locs_pred, (0, 2, 1))                            # (B,4,D)
    if d_pad != D:
        cls_t = jnp.pad(cls_t, ((0, 0), (0, 0), (0, d_pad - D)))
        locs_t = jnp.pad(locs_t, ((0, 0), (0, 0), (0, d_pad - D)))

    # ---- kernel 1: per-object global best default box (whole batch/tile) ---
    best_db, _ = pl.pallas_call(
        functools.partial(_bestdb_kernel, tile_d=tile_d, d_pad=d_pad),
        grid=(n_tiles,),
        in_specs=[
            pl.BlockSpec((B * n_obj, 5), lambda t: (0, 0)),
            pl.BlockSpec((_NC, tile_d), lambda t: (0, t)),
        ],
        out_specs=[
            pl.BlockSpec((B * n_obj, 1), lambda t: (0, 0)),
            pl.BlockSpec((B * n_obj, 1), lambda t: (0, 0)),
        ],
        out_shape=[
            jax.ShapeDtypeStruct((B * n_obj, 1), jnp.int32),
            jax.ShapeDtypeStruct((B * n_obj, 1), jnp.float32),
        ],
        compiler_params=pltpu.CompilerParams(
            dimension_semantics=("arbitrary",)),
    )(boxes_flat, db_consts)
    best_db = best_db.reshape(B, n_obj, 1)

    # ---- kernel 2: fused matching + per-box losses -------------------------
    # grid = (n_tiles, B): B innermost so db_consts' block index is constant
    # across the inner axis and its re-DMA is skipped.
    conf_neg, stats = pl.pallas_call(
        functools.partial(_fused_kernel, threshold=float(threshold),
                          d_real=int(D), tile_d=tile_d),
        grid=(n_tiles, B),
        in_specs=[
            pl.BlockSpec((1, n_obj, 5), lambda t, b: (b, 0, 0)),
            pl.BlockSpec((1, n_obj, 1), lambda t, b: (b, 0, 0)),
            pl.BlockSpec((_NC, tile_d), lambda t, b: (0, t)),
            pl.BlockSpec((1, C, tile_d), lambda t, b: (b, 0, t)),
            pl.BlockSpec((1, 4, tile_d), lambda t, b: (b, 0, t)),
        ],
        out_specs=[
            pl.BlockSpec((1, 1, tile_d), lambda t, b: (b, 0, t)),
            pl.BlockSpec((1, 1, 1, 128), lambda t, b: (b, t, 0, 0)),
        ],
        out_shape=[
            jax.ShapeDtypeStruct((B, 1, d_pad), jnp.float32),
            jax.ShapeDtypeStruct((B, n_tiles, 1, 128), jnp.float32),
        ],
        compiler_params=pltpu.CompilerParams(
            dimension_semantics=("parallel", "parallel")),
    )(boxes_obj, best_db, db_consts, cls_t, locs_t)

    # ---- tiny epilogue: hard-negative mining + final combine ---------------
    conf_neg = conf_neg[:, 0, :]                 # (B, d_pad); pos & pad already 0
    stats_v = stats[:, :, 0, :]                  # (B, n_tiles, 128)
    n_pos = jnp.sum(stats_v[:, :, 0], axis=1)    # (B,)  (exact integers in f32)
    conf_pos_sum = jnp.sum(stats_v[:, :, 1])
    loc_sum = jnp.sum(stats_v[:, :, 2])

    # NOTE: like the PyTorch module, this divides by zero if there are no
    # positives anywhere in the batch.
    n_pos_total = jnp.sum(n_pos)
    loc_loss = loc_sum / (n_pos_total * 4.0)     # SmoothL1 'mean' over positives

    k = int(min(d_pad, max(int(hard_neg_cap), 128)))
    topv, _ = jax.lax.top_k(conf_neg, k)         # (B, k) descending
    # TODO(synk): exact only while neg_pos * n_pos <= k per image.
    n_hard = jnp.minimum((neg_pos * n_pos).astype(jnp.int32), k)
    hard = jnp.arange(k, dtype=jnp.int32)[None, :] < n_hard[:, None]
    conf_hard_sum = jnp.sum(jnp.where(hard, topv, 0.0))
    conf_loss = (conf_hard_sum + conf_pos_sum) / n_pos_total
    return alpha * loc_loss + conf_loss


# --------------------------------------------------------------------------
# pure-jnp reference (direct translation of the PyTorch module, full sort)
# --------------------------------------------------------------------------
def multibox_loss_ref(locs_pred, cls_pred, boxes, labels, default_boxes,
                      threshold=0.5, neg_pos=3, alpha=1.0):
    f32 = jnp.float32
    db = jnp.asarray(default_boxes, f32)                                    # (D,4)
    dcx, dcy, dw, dh = db[:, 0], db[:, 1], db[:, 2], db[:, 3]
    dxmin = dcx - dw / 2.0
    dymin = dcy - dh / 2.0
    dxmax = dcx + dw / 2.0
    dymax = dcy + dh / 2.0
    area_d = (dxmax - dxmin) * (dymax - dymin)
    D = db.shape[0]

    def per_image(b_xy, lab):
        n_obj = b_xy.shape[0]
        xmin_o = b_xy[:, 0:1]
        ymin_o = b_xy[:, 1:2]
        xmax_o = b_xy[:, 2:3]
        ymax_o = b_xy[:, 3:4]
        iw = jnp.maximum(jnp.minimum(xmax_o, dxmax[None, :])
                         - jnp.maximum(xmin_o, dxmin[None, :]), 0.0)
        ih = jnp.maximum(jnp.minimum(ymax_o, dymax[None, :])
                         - jnp.maximum(ymin_o, dymin[None, :]), 0.0)
        inter = iw * ih
        area_o = (xmax_o - xmin_o) * (ymax_o - ymin_o)
        iou = inter / (area_o + area_d[None, :] - inter)                    # (n_obj,D)

        o_iota = jnp.arange(n_obj, dtype=jnp.int32)[:, None]
        d_iota = jnp.arange(D, dtype=jnp.int32)[None, :]
        best_ov = jnp.max(iou, axis=0)                                       # (D,)
        best_obj = jnp.min(jnp.where(iou >= best_ov[None, :], o_iota, n_obj), axis=0)
        best_ov_o = jnp.max(iou, axis=1, keepdims=True)
        best_db = jnp.min(jnp.where(iou >= best_ov_o, d_iota, D), axis=1)    # (n_obj,)

        forced = d_iota == best_db[:, None]                                  # (n_obj,D)
        is_forced = jnp.any(forced, axis=0)
        forced_obj = jnp.max(jnp.where(forced, o_iota, -1), axis=0)
        assigned = jnp.where(is_forced, forced_obj, best_obj)                # (D,)
        overlap = jnp.where(is_forced, 1.0, best_ov)

        lab_i = lab.astype(jnp.int32)
        label_d = jnp.where(overlap >= threshold, lab_i[assigned], 0)        # (D,)

        mb = b_xy[assigned]                                                  # (D,4)
        mcx = (mb[:, 0] + mb[:, 2]) * 0.5
        mcy = (mb[:, 1] + mb[:, 3]) * 0.5
        mw = mb[:, 2] - mb[:, 0]
        mh = mb[:, 3] - mb[:, 1]
        gcx = (mcx - dcx) / (dw / 10.0)
        gcy = (mcy - dcy) / (dh / 10.0)
        gw = jnp.log(mw / dw) * 5.0
        gh = jnp.log(mh / dh) * 5.0
        return label_d, jnp.stack([gcx, gcy, gw, gh], axis=1)                # (D,),(D,4)

    t_cls, t_locs = jax.vmap(per_image)(boxes.astype(f32), labels)

    cls_x = cls_pred.astype(f32)                                             # (B,D,C)
    m = jnp.max(cls_x, axis=-1, keepdims=True)
    lse = m[..., 0] + jnp.log(jnp.sum(jnp.exp(cls_x - m), axis=-1))
    picked = jnp.take_along_axis(cls_x, t_cls[..., None], axis=-1)[..., 0]
    conf_all = lse - picked                                                  # (B,D)

    diff = locs_pred.astype(f32) - t_locs
    ad = jnp.abs(diff)
    sl1 = jnp.where(ad < 1.0, 0.5 * diff * diff, ad - 0.5)
    pos = t_cls != 0
    n_pos = jnp.sum(pos, axis=1)
    n_pos_total = jnp.sum(n_pos).astype(f32)
    loc_loss = jnp.sum(jnp.where(pos[..., None], sl1, 0.0)) / (n_pos_total * 4.0)

    conf_pos_sum = jnp.sum(jnp.where(pos, conf_all, 0.0))
    conf_neg = jnp.where(pos, 0.0, conf_all)
    conf_neg_sorted = jnp.sort(conf_neg, axis=1)[:, ::-1]
    ranks = jnp.arange(conf_all.shape[1], dtype=jnp.int32)[None, :]
    hard = ranks < (neg_pos * n_pos)[:, None]
    conf_hard_sum = jnp.sum(jnp.where(hard, conf_neg_sorted, 0.0))
    conf_loss = (conf_hard_sum + conf_pos_sum) / n_pos_total
    return alpha * loc_loss + conf_loss


# --------------------------------------------------------------------------
if __name__ == "__main__":
    key = jax.random.PRNGKey(0)
    # small shapes; D deliberately NOT a multiple of 128 to exercise padding
    B, D, C, n_obj = 2, 300, 8, 4

    ks = jax.random.split(key, 10)
    # default boxes (cx, cy, w, h)
    dcx = jax.random.uniform(ks[0], (D,), minval=0.15, maxval=0.85)
    dcy = jax.random.uniform(ks[1], (D,), minval=0.15, maxval=0.85)
    dw = jax.random.uniform(ks[2], (D,), minval=0.10, maxval=0.30)
    dh = jax.random.uniform(ks[3], (D,), minval=0.10, maxval=0.30)
    default_boxes = jnp.stack([dcx, dcy, dw, dh], axis=1)                    # (D,4)

    # ground-truth boxes (xy) and labels (>0)
    gcx = jax.random.uniform(ks[4], (B, n_obj), minval=0.3, maxval=0.7)
    gcy = jax.random.uniform(ks[5], (B, n_obj), minval=0.3, maxval=0.7)
    gw = jax.random.uniform(ks[6], (B, n_obj), minval=0.2, maxval=0.4)
    gh = jax.random.uniform(ks[7], (B, n_obj), minval=0.2, maxval=0.4)
    boxes = jnp.stack([gcx - gw / 2, gcy - gh / 2,
                       gcx + gw / 2, gcy + gh / 2], axis=-1)                 # (B,n_obj,4)
    labels = jax.random.randint(ks[8], (B, n_obj), 1, C)                     # (B,n_obj)

    # network predictions
    locs_pred = 0.5 * jax.random.normal(ks[9], (B, D, 4), dtype=jnp.float32)
    cls_pred = jax.random.normal(jax.random.PRNGKey(42), (B, D, C),
                                 dtype=jnp.float32)

    ref = multibox_loss_ref(locs_pred, cls_pred, boxes, labels, default_boxes,
                            threshold=0.5, neg_pos=3, alpha=1.0)
    ref = jax.block_until_ready(ref)

    # multi-tile path (tile_d=128 -> 3 tiles + padded tail)
    loss_multi = multibox_loss(locs_pred, cls_pred, boxes, labels,
                               default_boxes, threshold=0.5, neg_pos=3,
                               alpha=1.0, tile_d=128)
    loss_multi = jax.block_until_ready(loss_multi)

    # default (single big tile) path
    loss_one = multibox_loss(locs_pred, cls_pred, boxes, labels,
                             default_boxes, threshold=0.5, neg_pos=3,
                             alpha=1.0)
    loss_one = jax.block_until_ready(loss_one)

    for name, loss in (("multi", loss_multi), ("one", loss_one)):
        assert bool(jnp.isfinite(loss)), f"non-finite loss ({name}): {loss}"
        assert abs(float(loss) - float(ref)) <= 1e-3 * max(1.0, abs(float(ref))), (
            f"mismatch ({name}): pallas={float(loss)} ref={float(ref)}")
    print("KERNEL_OK")
</pallas_src>

<mosaic_0001>
module attributes {stable_mosaic.version = 11 : i64} {
  func.func @_bestdb_kernel(%arg0: i32, %arg1: memref<8x5xf32, #tpu.memory_space<vmem>>, %arg2: memref<11x128xf32, #tpu.memory_space<vmem>>, %arg3: memref<8x1xi32, #tpu.memory_space<vmem>>, %arg4: memref<8x1xf32, #tpu.memory_space<vmem>>) attributes {dimension_semantics = [#tpu.dimension_semantics<arbitrary>], iteration_bounds = array<i64: 3>, scalar_prefetch = 0 : i64, scratch_operands = 0 : i64, tpu.core_type = #tpu.core_type<tc>, window_params = [{pipeline_mode = #tpu.pipeline_mode<synchronous>, transform_indices = @transform_0, window_bounds = array<i64: 8, 5>}, {transform_indices = @transform_1, window_bounds = array<i64: 11, 128>}, {pipeline_mode = #tpu.pipeline_mode<synchronous>, transform_indices = @transform_2, window_bounds = array<i64: 8, 1>}, {pipeline_mode = #tpu.pipeline_mode<synchronous>, transform_indices = @transform_3, window_bounds = array<i64: 8, 1>}]} {
    %c0 = arith.constant 0 : index
    %c0_0 = arith.constant 0 : index
    %0 = vector.load %arg1[%c0, %c0_0] : memref<8x5xf32, #tpu.memory_space<vmem>>, vector<8x5xf32>
    %c0_1 = arith.constant 0 : index
    %c0_2 = arith.constant 0 : index
    %1 = vector.load %arg2[%c0_1, %c0_2] : memref<11x128xf32, #tpu.memory_space<vmem>>, vector<11x128xf32>
    %2 = vector.extract_strided_slice %0 {offsets = [0, 0], sizes = [8, 1], strides = [1, 1]} : vector<8x5xf32> to vector<8x1xf32>
    %3 = vector.extract_strided_slice %0 {offsets = [0, 1], sizes = [8, 1], strides = [1, 1]} : vector<8x5xf32> to vector<8x1xf32>
    %4 = vector.extract_strided_slice %0 {offsets = [0, 2], sizes = [8, 1], strides = [1, 1]} : vector<8x5xf32> to vector<8x1xf32>
    %5 = vector.extract_strided_slice %0 {offsets = [0, 3], sizes = [8, 1], strides = [1, 1]} : vector<8x5xf32> to vector<8x1xf32>
    %6 = vector.extract_strided_slice %1 {offsets = [0, 0], sizes = [1, 128], strides = [1, 1]} : vector<11x128xf32> to vector<1x128xf32>
    %7 = vector.extract_strided_slice %1 {offsets = [1, 0], sizes = [1, 128], strides = [1, 1]} : vector<11x128xf32> to vector<1x128xf32>
    %8 = vector.extract_strided_slice %1 {offsets = [2, 0], sizes = [1, 128], strides = [1, 1]} : vector<11x128xf32> to vector<1x128xf32>
    %9 = vector.extract_strided_slice %1 {offsets = [3, 0], sizes = [1, 128], strides = [1, 1]} : vector<11x128xf32> to vector<1x128xf32>
    %10 = vector.extract_strided_slice %1 {offsets = [4, 0], sizes = [1, 128], strides = [1, 1]} : vector<11x128xf32> to vector<1x128xf32>
    %11 = vector.broadcast %4 : vector<8x1xf32> to vector<8x128xf32>
    %12 = vector.broadcast %8 : vector<1x128xf32> to vector<8x128xf32>
    %13 = arith.minimumf %11, %12 : vector<8x128xf32>
    %14 = vector.broadcast %2 : vector<8x1xf32> to vector<8x128xf32>
    %15 = vector.broadcast %6 : vector<1x128xf32> to vector<8x128xf32>
    %16 = arith.maximumf %14, %15 : vector<8x128xf32>
    %17 = arith.subf %13, %16 : vector<8x128xf32>
    %cst = arith.constant 0.000000e+00 : f32
    %18 = vector.broadcast %cst : f32 to vector<8x128xf32>
    %19 = arith.maximumf %17, %18 : vector<8x128xf32>
    %20 = vector.broadcast %5 : vector<8x1xf32> to vector<8x128xf32>
    %21 = vector.broadcast %9 : vector<1x128xf32> to vector<8x128xf32>
    %22 = arith.minimumf %20, %21 : vector<8x128xf32>
    %23 = vector.broadcast %3 : vector<8x1xf32> to vector<8x128xf32>
    %24 = vector.broadcast %7 : vector<1x128xf32> to vector<8x128xf32>
    %25 = arith.maximumf %23, %24 : vector<8x128xf32>
    %26 = arith.subf %22, %25 : vector<8x128xf32>
    %cst_3 = arith.constant 0.000000e+00 : f32
    %27 = vector.broadcast %cst_3 : f32 to vector<8x128xf32>
    %28 = arith.maximumf %26, %27 : vector<8x128xf32>
    %29 = arith.mulf %19, %28 : vector<8x128xf32>
    %30 = arith.subf %4, %2 : vector<8x1xf32>
    %31 = arith.subf %5, %3 : vector<8x1xf32>
    %32 = arith.mulf %30, %31 : vector<8x1xf32>
    %33 = vector.broadcast %32 : vector<8x1xf32> to vector<8x128xf32>
    %34 = vector.broadcast %10 : vector<1x128xf32> to vector<8x128xf32>
    %35 = arith.addf %33, %34 : vector<8x128xf32>
    %36 = arith.subf %35, %29 : vector<8x128xf32>
    %37 = arith.divf %29, %36 : vector<8x128xf32>
    %cst_4 = arith.constant dense<0xFF800000> : vector<8xf32>
    %38 = vector.multi_reduction <maximumf>, %37, %cst_4 [1] : vector<8x128xf32> to vector<8xf32>
    %39 = vector.shape_cast %38 : vector<8xf32> to vector<8x1xf32>
    %c128_i32 = arith.constant 128 : i32
    %40 = arith.muli %arg0, %c128_i32 : i32
    %41 = tpu.iota {dimensions = array<i32: 1>} : vector<8x128xi32>
    %42 = vector.broadcast %40 : i32 to vector<8x128xi32>
    %43 = arith.addi %42, %41 : vector<8x128xi32>
    %44 = vector.broadcast %39 : vector<8x1xf32> to vector<8x128xf32>
    %45 = arith.cmpf oge, %37, %44 : vector<8x128xf32>
    %c384_i32 = arith.constant 384 : i32
    %46 = vector.broadcast %c384_i32 : i32 to vector<8x128xi32>
    %47 = arith.select %45, %43, %46 : vector<8x128xi1>, vector<8x128xi32>
    %cst_5 = arith.constant dense<2147483647> : vector<8xi32>
    %48 = vector.multi_reduction <minsi>, %47, %cst_5 [1] : vector<8x128xi32> to vector<8xi32>
    %49 = vector.shape_cast %48 : vector<8xi32> to vector<8x1xi32>
    %c0_i32 = arith.constant 0 : i32
    %50 = arith.cmpi eq, %arg0, %c0_i32 : i32
    %51 = arith.extui %50 : i1 to i32
    %c0_i32_6 = arith.constant 0 : i32
    %52 = arith.cmpi ne, %51, %c0_i32_6 : i32
    scf.if %52 {
      %cst_17 = arith.constant -1.000000e+00 : f32
      %61 = vector.broadcast %cst_17 : f32 to vector<8x1xf32>
      %c0_18 = arith.constant 0 : index
      %c0_19 = arith.constant 0 : index
      %62 = vector.load %arg4[%c0_18, %c0_19] : memref<8x1xf32, #tpu.memory_space<vmem>>, vector<8x1xf32>
      tpu.vector_store %arg4[%c0_18, %c0_19], %61 {strides = array<i32>} : memref<8x1xf32, #tpu.memory_space<vmem>>, vector<8x1xf32>,
      %c0_i32_20 = arith.constant 0 : i32
      %63 = vector.broadcast %c0_i32_20 : i32 to vector<8x1xi32>
      %c0_21 = arith.constant 0 : index
      %c0_22 = arith.constant 0 : index
      %64 = vector.load %arg3[%c0_21, %c0_22] : memref<8x1xi32, #tpu.memory_space<vmem>>, vector<8x1xi32>
      tpu.vector_store %arg3[%c0_21, %c0_22], %63 {strides = array<i32>} : memref<8x1xi32, #tpu.memory_space<vmem>>, vector<8x1xi32>,
    } else {
    }
    %c0_7 = arith.constant 0 : index
    %c0_8 = arith.constant 0 : index
    %53 = vector.load %arg4[%c0_7, %c0_8] : memref<8x1xf32, #tpu.memory_space<vmem>>, vector<8x1xf32>
    %54 = arith.cmpf ogt, %39, %53 : vector<8x1xf32>
    %c0_9 = arith.constant 0 : index
    %c0_10 = arith.constant 0 : index
    %55 = vector.load %arg3[%c0_9, %c0_10] : memref<8x1xi32, #tpu.memory_space<vmem>>, vector<8x1xi32>
    %56 = arith.select %54, %49, %55 : vector<8x1xi1>, vector<8x1xi32>
    %c0_11 = arith.constant 0 : index
    %c0_12 = arith.constant 0 : index
    %57 = vector.load %arg3[%c0_11, %c0_12] : memref<8x1xi32, #tpu.memory_space<vmem>>, vector<8x1xi32>
    tpu.vector_store %arg3[%c0_11, %c0_12], %56 {strides = array<i32>} : memref<8x1xi32, #tpu.memory_space<vmem>>, vector<8x1xi32>,
    %c0_13 = arith.constant 0 : index
    %c0_14 = arith.constant 0 : index
    %58 = vector.load %arg4[%c0_13, %c0_14] : memref<8x1xf32, #tpu.memory_space<vmem>>, vector<8x1xf32>
    %59 = arith.select %54, %39, %58 : vector<8x1xi1>, vector<8x1xf32>
    %c0_15 = arith.constant 0 : index
    %c0_16 = arith.constant 0 : index
    %60 = vector.load %arg4[%c0_15, %c0_16] : memref<8x1xf32, #tpu.memory_space<vmem>>, vector<8x1xf32>
    tpu.vector_store %arg4[%c0_15, %c0_16], %59 {strides = array<i32>} : memref<8x1xf32, #tpu.memory_space<vmem>>, vector<8x1xf32>,
    return
  }
  func.func @transform_0(%arg0: i32) -> (i32, i32) {
    %c0_i32 = arith.constant 0 : i32
    %c0_i32_0 = arith.constant 0 : i32
    %c0_i32_1 = arith.constant 0 : i32
    return %c0_i32, %c0_i32_0 : i32, i32
  }
  func.func @transform_1(%arg0: i32) -> (i32, i32) {
    %c0_i32 = arith.constant 0 : i32
    %c0_i32_0 = arith.constant 0 : i32
    return %c0_i32, %arg0 : i32, i32
  }
  func.func @transform_2(%arg0: i32) -> (i32, i32) {
    %c0_i32 = arith.constant 0 : i32
    %c0_i32_0 = arith.constant 0 : i32
    %c0_i32_1 = arith.constant 0 : i32
    return %c0_i32, %c0_i32_0 : i32, i32
  }
  func.func @transform_3(%arg0: i32) -> (i32, i32) {
    %c0_i32 = arith.constant 0 : i32
    %c0_i32_0 = arith.constant 0 : i32
    %c0_i32_1 = arith.constant 0 : i32
    return %c0_i32, %c0_i32_0 : i32, i32
  }
}

</mosaic_0001>

<llo_original>
// kernel: tpu_custom_call.1
$region0: #{tpu_custom_call.1}
  #allocation0 [shape = 'u32[]', space=smem, size = 0x4, offset = 0x4, fixed_abs, tag = 'smem constant byte address 0x4 - core index']
  #allocation1 [shape = 'u32[72,128]{1,0:T(1,128)}', space=vmem, size = 0x9000, scoped, tag = 'internal scratch']
  %s0 = inlined_call_operand.hbm [shape: f32[8,5], index: 0, kind: input, shape index: {}]
  %s1 = inlined_call_operand.hbm [shape: f32[11,384], index: 1, kind: input, shape index: {}]
  %s2 = inlined_call_operand.vmem [shape: s32[8,1], index: 2, kind: output, shape index: {0}]
  %s3 = inlined_call_operand.vmem [shape: f32[8,1], index: 3, kind: output, shape index: {1}]
  %4 = xla_tuple %s2, %s3
  %s5 = sld [smem:[#allocation0]]
  $region61: #{tpu_custom_call.1} parent=0
    _
  %s7 = ssub.s32 1, %s5
  %s8 = scalar_select 0, %s7, %s5
  $region1: #{tpu_custom_call.1} parent=0
    #allocation2 [shape = 'u8[4096]{0}', space=vmem, size = 0x1000, scoped, tag = 'input window, operand 0, single buffered']
    #allocation3 [shape = 's32[2]{0}', space=sflag, size = 0x8, scoped, tag = 'scoped memory for tpu_custom_call.1']
    #allocation4 [shape = 'u8[16384]{0}', space=vmem, size = 0x4000, scoped, tag = 'input window, operand 1']
    #allocation5 [shape = 's32[2]{0}', space=sflag, size = 0x8, scoped, tag = 'scoped memory for tpu_custom_call.1']
    %9 = vsyncpa [#allocation3], 0
    %10 = vsyncpa [#allocation5], 0
    %s11 = scalar_lea.sflag [#allocation5], 1
    %12 = vsyncpa %s11, 0
    loop: start=0, step=1, limit=5
    $region2: #{tpu_custom_call.1} parent=1 // loop_pre_header
      _
    $region3: #{tpu_custom_call.1} parent=1 // loop_header
      %s14 = sphi 0, %s18
      %p15 = scmp.ge.s32.totalorder %s14, 5
      %s22 = sphi 0, %s22
      %s24 = sphi 0, %s22
      %s25 = sphi 0, %s24
      %s39 = sphi 0, %s25
      %s45 = sphi 0, %s47
      %s48 = sphi 0, %s45
      %s49 = sphi 0, %s48
      %s65 = sphi 0, %s49
      %s69 = sphi 0, %s69
      %s71 = sphi 0, %s69
      %s72 = sphi 0, %s71
      %s86 = sphi 0, %s72
      %s90 = sphi 0, %s90
      %s92 = sphi 0, %s90
      %s93 = sphi 0, %s92
      %s107 = sphi 0, %s93
    $region4: #{tpu_custom_call.1} parent=1 // loop_header_branch
      %17 = sbr.rel (%p15) target = $region8
    $region5: #{tpu_custom_call.1} parent=1 // loop_body
      %s19 = ssub.s32 %s14, 1
      %s20 = ssub.s32 %s14, 2
      %s21 = sadd.s32 %s14, 1
      %s23 = sadd.s32 %s22, 1
      %p26 = scmp.eq.s32.totalorder %s14, 2
      %p27 = scmp.ne.s32.totalorder %s22, %s24
      %p28 = scmp.eq.s32.totalorder %s14, 0
      %p29 = por %p27, %p28
      %p30 = scmp.ne.s32.totalorder %s22, %s24
      %p31 = scmp.eq.s32.totalorder %s19, 2
      %p32 = por %p30, %p31
      %p33 = scmp.ne.s32.totalorder %s24, %s25
      %p34 = scmp.eq.s32.totalorder %s19, 0
      %p35 = por %p33, %p34
      %p36 = scmp.ne.s32.totalorder %s24, %s25
      %p37 = scmp.eq.s32.totalorder %s20, 2
      %p38 = por %p36, %p37
      %p40 = scmp.ne.s32.totalorder %s25, %s39
      %p41 = scmp.eq.s32.totalorder %s20, 0
      %p42 = por %p40, %p41
      %s43 = ssub.s32 %s14, %s21
      %p44 = scmp.eq.s32.totalorder %s43, 0
      %s46 = sadd.s32 %s45, 1
      %s47 = scalar_select %p44, %s45, %s46
      %p50 = pneg %p44
      %p51 = scmp.eq.s32.totalorder %s14, 2
      %p52 = por %p50, %p51
      %p53 = scmp.ne.s32.totalorder %s45, %s48
      %p54 = scmp.eq.s32.totalorder %s14, 0
      %p55 = por %p53, %p54
      %p56 = scmp.ne.s32.totalorder %s45, %s48
      %p57 = scmp.eq.s32.totalorder %s19, 2
      %p58 = por %p56, %p57
      %p59 = scmp.ne.s32.totalorder %s48, %s49
      %p60 = scmp.eq.s32.totalorder %s19, 0
      %p61 = por %p59, %p60
      %p62 = scmp.ne.s32.totalorder %s48, %s49
      %p63 = scmp.eq.s32.totalorder %s20, 2
      %p64 = por %p62, %p63
      %p66 = scmp.ne.s32.totalorder %s49, %s65
      %p67 = scmp.eq.s32.totalorder %s20, 0
      %p68 = por %p66, %p67
      %s70 = sadd.s32 %s69, 1
      %p73 = scmp.eq.s32.totalorder %s14, 2
      %p74 = scmp.ne.s32.totalorder %s69, %s71
      %p75 = scmp.eq.s32.totalorder %s14, 0
      %p76 = por %p74, %p75
      %p77 = scmp.ne.s32.totalorder %s69, %s71
      %p78 = scmp.eq.s32.totalorder %s19, 2
      %p79 = por %p77, %p78
      %p80 = scmp.ne.s32.totalorder %s71, %s72
      %p81 = scmp.eq.s32.totalorder %s19, 0
      %p82 = por %p80, %p81
      %p83 = scmp.ne.s32.totalorder %s71, %s72
      %p84 = scmp.eq.s32.totalorder %s20, 2
      %p85 = por %p83, %p84
      %p87 = scmp.ne.s32.totalorder %s72, %s86
      %p88 = scmp.eq.s32.totalorder %s20, 0
      %p89 = por %p87, %p88
      %s91 = sadd.s32 %s90, 1
      %p94 = scmp.eq.s32.totalorder %s14, 2
      %p95 = scmp.ne.s32.totalorder %s90, %s92
      %p96 = scmp.eq.s32.totalorder %s14, 0
      %p97 = por %p95, %p96
      %p98 = scmp.ne.s32.totalorder %s90, %s92
      %p99 = scmp.eq.s32.totalorder %s19, 2
      %p100 = por %p98, %p99
      %p101 = scmp.ne.s32.totalorder %s92, %s93
      %p102 = scmp.eq.s32.totalorder %s19, 0
      %p103 = por %p101, %p102
      %p104 = scmp.ne.s32.totalorder %s92, %s93
      %p105 = scmp.eq.s32.totalorder %s20, 2
      %p106 = por %p104, %p105
      %p108 = scmp.ne.s32.totalorder %s93, %s107
      %p109 = scmp.eq.s32.totalorder %s20, 0
      %p110 = por %p108, %p109
      %p111 = scmp.le.s32.totalorder 1, %s14
      %p112 = scmp.lt.s32.totalorder %s14, 4
      %p113 = pnand %p111, %p112
      %p114 = pneg %p113
      // Predicated region
      $region9: #{tpu_custom_call.1} parent=5 // pred_check
        _
      $region10: #{tpu_custom_call.1} parent=5 // pred_check_branch
        %116 = sbr.rel (%p113) target = $region12
      $region11: #{tpu_custom_call.1} parent=5 // pred_region
        %s117 = ssub.s32 %s14, 1
        // Predicated region
        $region13: #{tpu_custom_call.1} parent=11 // pred_check
          %p118 = pneg %p35
        $region14: #{tpu_custom_call.1} parent=11 // pred_check_branch
          %120 = sbr.rel (%p118) target = $region16
        $region15: #{tpu_custom_call.1} parent=11 // pred_region
          %122 = vsyncadd [#allocation3], 0
          %s124 = sshll.u32 %s0, 4
          %s125 = int_to_ptr.hbm [resolvable:$true] %s124
          %s126 = sshll.u32 [#allocation2], 4
          %s127 = int_to_ptr.vmem [resolvable:$true] %s126
          %129 = dma.hbm_to_vmem [thread:$0]  %s125, 128, %s127, [#allocation3]
        $region16: #{tpu_custom_call.1} parent=11 // pred_fallthru
          _
      $region12: #{tpu_custom_call.1} parent=5 // pred_fallthru
        _
      %p130 = scmp.lt.s32.totalorder %s14, 3
      // Predicated region
      $region17: #{tpu_custom_call.1} parent=5 // pred_check
        %p131 = pneg %p130
      $region18: #{tpu_custom_call.1} parent=5 // pred_check_branch
        %133 = sbr.rel (%p131) target = $region20
      $region19: #{tpu_custom_call.1} parent=5 // pred_region
        // Predicated region
        $region21: #{tpu_custom_call.1} parent=19 // pred_check
          %p134 = pneg %p55
        $region22: #{tpu_custom_call.1} parent=19 // pred_check_branch
          %136 = sbr.rel (%p134) target = $region24
        $region23: #{tpu_custom_call.1} parent=19 // pred_region
          %s137 = sand.u32 %s45, 1
          %s138 = scalar_lea.sflag [#allocation5], %s137
          %s139 = sand.u32 %s45, 1
          %s140 = smul.addr %s139, 16
          %s141 = scalar_lea.vmem [#allocation4], %s140
          %143 = vsyncadd %s138, 0
          %s144 = smul.addr %s14, 8
          %s145 = scalar_lea.hbm %s1, %s144
          %s146 = sshll.u32 %s145, 4
          %s147 = int_to_ptr.hbm [resolvable:$true] %s146
          %s148 = sshll.u32 %s141, 4
          %s149 = int_to_ptr.vmem [resolvable:$true] %s148
          %154 = dma.hbm_to_vmem [thread:$0]  %s147, 256, %s149, %s138, 384, 128, 8
        $region24: #{tpu_custom_call.1} parent=19 // pred_fallthru
          _
      $region20: #{tpu_custom_call.1} parent=5 // pred_fallthru
        _
      %p155 = scmp.le.s32.totalorder 1, %s14
      %p156 = scmp.lt.s32.totalorder %s14, 4
      %p157 = pnand %p155, %p156
      %p158 = pneg %p157
      // Predicated region
      $region25: #{tpu_custom_call.1} parent=5 // pred_check
        _
      $region26: #{tpu_custom_call.1} parent=5 // pred_check_branch
        %160 = sbr.rel (%p157) target = $region28
      $region27: #{tpu_custom_call.1} parent=5 // pred_region
        %s161 = ssub.s32 %s14, 1
        // Predicated region
        $region29: #{tpu_custom_call.1} parent=27 // pred_check
          %p162 = pneg %p35
        $region30: #{tpu_custom_call.1} parent=27 // pred_check_branch
          %164 = sbr.rel (%p162) target = $region32
        $region31: #{tpu_custom_call.1} parent=27 // pred_region
          %166 = dma.done [#allocation3], 128
        $region32: #{tpu_custom_call.1} parent=27 // pred_fallthru
          _
        %s167 = sand.u32 %s48, 1
        %s168 = scalar_lea.sflag [#allocation5], %s167
        %s169 = sand.u32 %s48, 1
        %s170 = smul.addr %s169, 16
        %s171 = scalar_lea.vmem [#allocation4], %s170
        // Predicated region
        $region33: #{tpu_custom_call.1} parent=27 // pred_check
          %p172 = pneg %p61
        $region34: #{tpu_custom_call.1} parent=27 // pred_check_branch
          %174 = sbr.rel (%p172) target = $region36
        $region35: #{tpu_custom_call.1} parent=27 // pred_region
          %176 = dma.done %s168, 256
        $region36: #{tpu_custom_call.1} parent=27 // pred_fallthru
          _
        %p177 = pneg %p35
        %p178 = pneg %p32
        %s179 = sand.u32 %s48, 1
        %s180 = scalar_lea.sflag [#allocation5], %s179
        %s181 = sand.u32 %s48, 1
        %s182 = smul.addr %s181, 16
        %s183 = scalar_lea.vmem [#allocation4], %s182
        %p184 = pneg %p61
        %p185 = pneg %p58
        %p186 = pneg %p82
        %p187 = pneg %p79
        %p188 = pneg %p103
        %p189 = pneg %p100
        %v190 = vld [vmem:[#allocation2] sm:$0xff]
        %v191 = vld [vmem:[%s171] sm:$0xff]
        %193 = vset.pattern.permute.xlu0 2
        %194 = vperm.xlu0 %193, %v190
        %v195 = vpop.permute.xlu0 %194
        %v197 = vperm.slane %v191, 2
        %v198 = vmin.f32 %v195, %v197
        %199 = vset.pattern.permute.xlu0 0
        %200 = vperm.xlu0 %199, %v190
        %v201 = vpop.permute.xlu0 %200
        %v203 = vperm.slane %v191, 0
        %v204 = vmax.f32 %v201, %v203
        %v205 = vsub.f32 %v198, %v204
        %v206 = vmax.f32 %v205, 0.0
        %207 = vset.pattern.permute.xlu0 3
        %208 = vperm.xlu0 %207, %v190
        %v209 = vpop.permute.xlu0 %208
        %v211 = vperm.slane %v191, 3
        %v212 = vmin.f32 %v209, %v211
        %213 = vset.pattern.permute.xlu0 1
        %214 = vperm.xlu0 %213, %v190
        %v215 = vpop.permute.xlu0 %214
        %v217 = vperm.slane %v191, 1
        %v218 = vmax.f32 %v215, %v217
        %v219 = vsub.f32 %v212, %v218
        %v220 = vmax.f32 %v219, 0.0
        %v221 = vmul.f32 %v206, %v220
        %222 = vrot.lane.b32.xlu0 %v190, 2
        %v223 = vpop.permute.xlu0 %222
        %v225 = vsub.f32 %v190, %v223
        %227 = vrot.lane.b32.xlu0 %v225, 127
        %v228 = vpop.permute.xlu0 %227
        %v230 = vmul.f32 %v225, %v228
        %232 = vset.pattern.permute.xlu0 2
        %233 = vperm.xlu0 %232, %v230
        %v234 = vpop.permute.xlu0 %233
        %v236 = vperm.slane %v191, 4
        %v237 = vadd.f32 %v234, %v236
        %v238 = vsub.f32 %v237, %v221
        %v239 = vrcp.pop %v238
        %v240 = vmul.f32 %v238, %v239
        %v241 = vsub.f32 1.0, %v240
        %v242 = vmul.f32 %v239, %v241
        %v243 = vadd.f32 %v239, %v242
        %vm244 = vweird.f32 %v238
        %vm245 = vweird.f32 %v239
        %vm246 = vmor %vm244, %vm245
        %v247 = vsel %vm246, %v239, %v243
        %v248 = vand.u32 2147483647, %v238
        %vm249 = vcmp.eq.f32.partialorder %v248, 8.507059e+37
        %v250 = vand.u32 %v238, 2147483648
        %v251 = vor.u32 1.1754944e-38, %v250
        %v252 = vsel %vm249, %v251, %v247
        %v253 = vmul.f32 %v221, %v252
        %254 = vmax.xlane.f32.xlu0 %v253
        %v255 = vpop.xlane.xlu0 %254
        %s256 = smul.u32 %s19, 128
        %v257 = vlaneseq
        %v258 = vand.u32 %v257, 127
        %v259 = vstv %s256
        %v260 = vadd.s32 %v259, %v258
        %vm261 = vcmp.ge.f32.partialorder %v253, %v255
        %v262 = vsel %vm261, %v260, 384
        %v263 = vand.u32 %v262, 65535
        %v264 = vshra.s32 %v262, 16
        %v265 = vcvt.s32.f32 %v263
        %v266 = vcvt.s32.f32 %v264
        %267 = vmin.xlane.f32.xlu0 %v266
        %v268 = vpop.xlane.xlu0 %267
        %vm269 = vcmp.eq.f32.partialorder %v266, %v268
        %v270 = vsel %vm269, %v265, inf
        %271 = vmin.xlane.f32.xlu0 %v270
        %v272 = vpop.xlane.xlu0 %271
        %v273 = vcvt.f32.s32 %v272
        %v274 = vcvt.f32.s32 %v268
        %v275 = vshll.u32 %v274, 16
        %v276 = vadd.s32 %v275, %v273
        %p277 = scmp.eq.s32.totalorder %s19, 0
        // Predicated region
        $region37: #{tpu_custom_call.1} parent=27 // pred_check
          %p278 = pneg %p277
        $region38: #{tpu_custom_call.1} parent=27 // pred_check_branch
          %280 = sbr.rel (%p278) target = $region40
        $region39: #{tpu_custom_call.1} parent=27 // pred_region
          %vm281 = vcmask 7168
          %282 = vst.msk [vmem:[%s3] sm:$0xff] %vm281, -1.0
          %283 = vst.msk [vmem:[%s2] sm:$0xff] %vm281, 0
        $region40: #{tpu_custom_call.1} parent=27 // pred_fallthru
          _
        %v284 = vld [vmem:[%s3] sm:$0xff]
        %vm285 = vcmp.gt.f32.partialorder %v255, %v284
        %v286 = vld [vmem:[%s2] sm:$0xff]
        %v287 = vsel %vm285, %v276, %v286
        %vm288 = vcmask 7168
        %289 = vst.msk [vmem:[%s2] sm:$0xff] %vm288, %v287
        %v290 = vld [vmem:[%s3] sm:$0xff]
        %v291 = vsel %vm285, %v255, %v290
        %292 = vst.msk [vmem:[%s3] sm:$0xff] %vm288, %v291
        // Predicated region
        $region41: #{tpu_custom_call.1} parent=27 // pred_check
          %p293 = pneg %p79
        $region42: #{tpu_custom_call.1} parent=27 // pred_check_branch
          %295 = sbr.rel (%p293) target = $region44
        $region43: #{tpu_custom_call.1} parent=27 // pred_region
          _
        $region44: #{tpu_custom_call.1} parent=27 // pred_fallthru
          _
        // Predicated region
        $region45: #{tpu_custom_call.1} parent=27 // pred_check
          %p296 = pneg %p100
        $region46: #{tpu_custom_call.1} parent=27 // pred_check_branch
          %298 = sbr.rel (%p296) target = $region48
        $region47: #{tpu_custom_call.1} parent=27 // pred_region
          _
        $region48: #{tpu_custom_call.1} parent=27 // pred_fallthru
          _
        // Predicated region
        $region49: #{tpu_custom_call.1} parent=27 // pred_check
          %p299 = pneg %p79
        $region50: #{tpu_custom_call.1} parent=27 // pred_check_branch
          %301 = sbr.rel (%p299) target = $region52
        $region51: #{tpu_custom_call.1} parent=27 // pred_region
          _
        $region52: #{tpu_custom_call.1} parent=27 // pred_fallthru
          _
        // Predicated region
        $region53: #{tpu_custom_call.1} parent=27 // pred_check
          %p302 = pneg %p100
        $region54: #{tpu_custom_call.1} parent=27 // pred_check_branch
          %304 = sbr.rel (%p302) target = $region56
        $region55: #{tpu_custom_call.1} parent=27 // pred_region
          _
        $region56: #{tpu_custom_call.1} parent=27 // pred_fallthru
          _
      $region28: #{tpu_custom_call.1} parent=5 // pred_fallthru
        _
      %p305 = scmp.le.s32.totalorder 2, %s14
      // Predicated region
      $region57: #{tpu_custom_call.1} parent=5 // pred_check
        %p306 = pneg %p305
      $region58: #{tpu_custom_call.1} parent=5 // pred_check_branch
        %308 = sbr.rel (%p306) target = $region60
      $region59: #{tpu_custom_call.1} parent=5 // pred_region
        %s309 = ssub.s32 %s14, 2
      $region60: #{tpu_custom_call.1} parent=5 // pred_fallthru
        _
    $region6: #{tpu_custom_call.1} parent=1 // loop_footer
      %s18 = sadd.s32 1, %s14
    $region7: #{tpu_custom_call.1} parent=1 // loop_footer_branch
      %13 = sbr.rel target = $region3
    $region8: #{tpu_custom_call.1} parent=1 // loop_exit
      _
    %310 = vsyncpa [#allocation3], 1
    %s311 = scalar_lea.sflag [#allocation3], 1
    %312 = vsyncpa %s311, 1
    %313 = vsyncpa [#allocation5], 1
    %s314 = scalar_lea.sflag [#allocation5], 1
    %315 = vsyncpa %s314, 1

</llo_original>
